<compile_context>
chip_gen: v6e
topology: v6e:2x2x1
jax: 0.10.0
libtpu: 0.0.40
codegen_flags: <defaults>
</compile_context>

<pallas_src>
import jax
import jax.numpy as jnp
from jax.experimental import pallas as pl
from jax.experimental.pallas import tpu as pltpu

NUM_PARAMETERS = 32  # self.params = nn.Parameter(torch.randn(num_parameters))


# --------------------------------------------------------------------------
# Single-evaluation kernel: the literal QASVM_model.forward() (one cost value).
# Pure VPU/EUP/XLU: elementwise outer-product quadratic form + reductions.
# --------------------------------------------------------------------------
def qasvm_cost_kernel(p_row_ref, p_col_ref, q_ref, out_ref):
    # p_row_ref: (1, P) f32   p_col_ref: (P, 1) f32   q_ref: (P, P) f32
    # out_ref:   (1, 1) f32
    p_row = p_row_ref[...]
    p_col = p_col_ref[...]
    q = q_ref[...]
    # theta^T Q theta = sum(Q * outer(theta, theta))  -- VPU multiply + reduce.
    quad = jnp.sum(q * (p_col * p_row), axis=(0, 1), keepdims=True)   # (1, 1)
    trig = jnp.sum(jnp.sin(p_row), axis=(0, 1), keepdims=True)        # (1, 1)
    out_ref[...] = quad + jnp.float32(0.1) * trig


def qasvm_forward(params, q_matrix):
    """Forward pass of QASVM_model: returns a (1,) f32 array [cost(params)]."""
    p = params.astype(jnp.float32)
    p_row = p.reshape(1, -1)                    # (1, P)
    p_col = p.reshape(-1, 1)                    # (P, 1)
    q = q_matrix.astype(jnp.float32)            # (P, P)
    out = pl.pallas_call(
        qasvm_cost_kernel,
        out_shape=jax.ShapeDtypeStruct((1, 1), jnp.float32),
        in_specs=[pl.BlockSpec(memory_space=pltpu.MemorySpace.VMEM)] * 3,
        out_specs=pl.BlockSpec(memory_space=pltpu.MemorySpace.VMEM),
    )(p_row, p_col, q)
    return out.reshape(1)


# --------------------------------------------------------------------------
# Finite-difference stencil kernel: ONE call produces the 2P+1 cost values
# [cost(theta), cost(theta + eps*e_i) for i, cost(theta - eps*e_i) for i]
# needed by GeneralFunction.backward's central-difference path, plus the
# forward value in column 0 (so no separate single-eval launch is needed in
# the FD workflow).
#
# The perturbation columns are synthesized in-kernel from the (P, 1) parameter
# column and a compile-time eps, so the only inputs DMA'd are params (128 B)
# and Q (4 KiB).  Output is a lane-dense (1, B_pad) row (B_pad multiple of
# 128 -> unmasked vst); pad columns replicate the base parameters and are
# discarded by the wrapper slice.
# --------------------------------------------------------------------------
def make_fd_stencil_kernel(num_params, b_pad, eps):
    p_count = int(num_params)
    eps_f = float(eps)

    def fd_stencil_kernel(p_col_ref, q_ref, out_ref):
        # p_col_ref: (P, 1) f32   q_ref: (P, P) f32   out_ref: (1, B_pad) f32
        p_col = p_col_ref[...]                                        # (P, 1)
        q = q_ref[...]                                                # (P, P)

        row = jax.lax.broadcasted_iota(jnp.int32, (p_count, b_pad), 0)
        col = jax.lax.broadcasted_iota(jnp.int32, (p_count, b_pad), 1)
        eps_c = jnp.float32(eps_f)
        zero = jnp.float32(0.0)
        # Column 0: unperturbed.  Columns 1..P: +eps on the diagonal.
        # Columns P+1..2P: -eps on the diagonal.  Columns beyond 2P: base copy.
        delta = (jnp.where(col == row + 1, eps_c, zero)
                 - jnp.where(col == row + 1 + p_count, eps_c, zero))
        pt = p_col + delta                                            # (P, B_pad)

        w = jnp.dot(q, pt, preferred_element_type=jnp.float32)        # MXU
        quad = jnp.sum(pt * w, axis=0, keepdims=True)                 # (1, B_pad)
        trig = jnp.sum(jnp.sin(pt), axis=0, keepdims=True)            # (1, B_pad)
        out_ref[...] = quad + jnp.float32(0.1) * trig

    return fd_stencil_kernel


def qasvm_fd_costs(params, q_matrix, eps=1e-3):
    """Central-difference stencil costs for one parameter vector.

    Returns a (2P+1,) f32 array:
      costs[0]        = cost(params)                (the forward value)
      costs[1:P+1]    = cost(params + eps * e_i)
      costs[P+1:2P+1] = cost(params - eps * e_i)
    """
    p_count = params.shape[0]
    n_evals = 2 * p_count + 1
    b_pad = ((n_evals + 127) // 128) * 128          # lane-dense output row
    p_col = params.astype(jnp.float32).reshape(p_count, 1)
    q = q_matrix.astype(jnp.float32)
    out = pl.pallas_call(
        make_fd_stencil_kernel(p_count, b_pad, eps),
        out_shape=jax.ShapeDtypeStruct((1, b_pad), jnp.float32),
        in_specs=[pl.BlockSpec(memory_space=pltpu.MemorySpace.VMEM)] * 2,
        out_specs=pl.BlockSpec(memory_space=pltpu.MemorySpace.VMEM),
    )(p_col, q)
    return out[0, :n_evals]


# --------------------------------------------------------------------------
# Pure-JAX reference.
# --------------------------------------------------------------------------
def qasvm_forward_ref(params, q_matrix):
    p = params.astype(jnp.float32)
    quad = p @ q_matrix.astype(jnp.float32) @ p
    trig = jnp.sum(jnp.sin(p))
    return (quad + 0.1 * trig).reshape(1)


if __name__ == "__main__":
    key = jax.random.PRNGKey(0)
    k_params, k_q = jax.random.split(key)

    # nn.Parameter(torch.randn(num_parameters)) -> deterministic normal init.
    params = jax.random.normal(k_params, (NUM_PARAMETERS,), dtype=jnp.float32)

    # Surrogate "quantum" cost landscape: fixed symmetric matrix.
    a = jax.random.normal(k_q, (NUM_PARAMETERS, NUM_PARAMETERS), dtype=jnp.float32)
    q_matrix = (a + a.T) * 0.5 / NUM_PARAMETERS

    # --- module forward(): single cost evaluation ---
    out = jax.block_until_ready(qasvm_forward(params, q_matrix))
    ref = qasvm_forward_ref(params, q_matrix)
    assert out.shape == (1,) and out.dtype == jnp.float32
    assert jnp.allclose(out, ref, rtol=1e-5, atol=1e-5), (out, ref)

    # --- FD workflow: ONE kernel call gives forward cost + all 2P perturbed
    #     costs (no second single-eval launch needed). ---
    eps = 1e-3
    costs = jax.block_until_ready(qasvm_fd_costs(params, q_matrix, eps=eps))
    assert costs.shape == (2 * NUM_PARAMETERS + 1,)

    # Reference stencil (built host-side only for verification).
    eye = jnp.eye(NUM_PARAMETERS, dtype=jnp.float32)
    batch = jnp.concatenate(
        [params[None, :], params[None, :] + eps * eye, params[None, :] - eps * eye],
        axis=0)                                                 # (2P+1, P)
    costs_ref = jax.vmap(lambda p: qasvm_forward_ref(p, q_matrix)[0])(batch)
    assert jnp.allclose(costs, costs_ref, rtol=1e-5, atol=1e-5)

    # Forward value is column 0 of the stencil output.
    assert jnp.allclose(costs[0], ref[0], rtol=1e-5, atol=1e-5)

    # Central-difference gradient vs. autodiff of the surrogate cost.
    g_fd = (costs[1:NUM_PARAMETERS + 1] - costs[NUM_PARAMETERS + 1:]) / (2.0 * eps)
    g_ref = jax.grad(lambda p: qasvm_forward_ref(p, q_matrix)[0])(params)
    assert jnp.allclose(g_fd, g_ref, rtol=2e-2, atol=2e-3)

    # TODO(synk): the opaque qasvm.cost_fn / grad_fn callables and the custom
    # autograd backward in GeneralFunction have no Pallas equivalent; only the
    # forward cost evaluation (single + FD-stencil batch) is kerneled here.
    print("KERNEL_OK")
</pallas_src>

<mosaic_0001>
module attributes {stable_mosaic.version = 11 : i64} {
  func.func @qasvm_cost_kernel(%arg0: memref<1x32xf32, #tpu.memory_space<vmem>>, %arg1: memref<32x1xf32, #tpu.memory_space<vmem>>, %arg2: memref<32x32xf32, #tpu.memory_space<vmem>>, %arg3: memref<1x1xf32, #tpu.memory_space<vmem>>) attributes {dimension_semantics = [], scalar_prefetch = 0 : i64, scratch_operands = 0 : i64, tpu.core_type = #tpu.core_type<tc>} {
    %c0 = arith.constant 0 : index
    %c0_0 = arith.constant 0 : index
    %0 = vector.load %arg0[%c0, %c0_0] : memref<1x32xf32, #tpu.memory_space<vmem>>, vector<1x32xf32>
    %c0_1 = arith.constant 0 : index
    %c0_2 = arith.constant 0 : index
    %1 = vector.load %arg1[%c0_1, %c0_2] : memref<32x1xf32, #tpu.memory_space<vmem>>, vector<32x1xf32>
    %c0_3 = arith.constant 0 : index
    %c0_4 = arith.constant 0 : index
    %2 = vector.load %arg2[%c0_3, %c0_4] : memref<32x32xf32, #tpu.memory_space<vmem>>, vector<32x32xf32>
    %3 = vector.broadcast %1 : vector<32x1xf32> to vector<32x32xf32>
    %4 = vector.broadcast %0 : vector<1x32xf32> to vector<32x32xf32>
    %5 = arith.mulf %3, %4 : vector<32x32xf32>
    %6 = arith.mulf %2, %5 : vector<32x32xf32>
    %7 = vector.shape_cast %6 : vector<32x32xf32> to vector<1x32x32xf32>
    %cst = arith.constant dense<0.000000e+00> : vector<1xf32>
    %8 = vector.multi_reduction <add>, %7, %cst [1, 2] : vector<1x32x32xf32> to vector<1xf32>
    %9 = vector.shape_cast %8 : vector<1xf32> to vector<1x1x1xf32>
    %10 = vector.extract %9[0, 0, 0] : f32 from vector<1x1x1xf32>
    %11 = vector.broadcast %10 : f32 to vector<1x1xf32>
    %12 = math.sin %0 : vector<1x32xf32>
    %13 = vector.shape_cast %12 : vector<1x32xf32> to vector<1x1x32xf32>
    %cst_5 = arith.constant dense<0.000000e+00> : vector<1xf32>
    %14 = vector.multi_reduction <add>, %13, %cst_5 [1, 2] : vector<1x1x32xf32> to vector<1xf32>
    %15 = vector.shape_cast %14 : vector<1xf32> to vector<1x1x1xf32>
    %16 = vector.extract %15[0, 0, 0] : f32 from vector<1x1x1xf32>
    %17 = vector.broadcast %16 : f32 to vector<1x1xf32>
    %cst_6 = arith.constant 1.000000e-01 : f32
    %18 = vector.broadcast %cst_6 : f32 to vector<1x1xf32>
    %19 = arith.mulf %18, %17 : vector<1x1xf32>
    %20 = arith.addf %11, %19 : vector<1x1xf32>
    %c0_7 = arith.constant 0 : index
    %c0_8 = arith.constant 0 : index
    %21 = vector.load %arg3[%c0_7, %c0_8] : memref<1x1xf32, #tpu.memory_space<vmem>>, vector<1x1xf32>
    tpu.vector_store %arg3[%c0_7, %c0_8], %20 {strides = array<i32>} : memref<1x1xf32, #tpu.memory_space<vmem>>, vector<1x1xf32>,
    return
  }
}

</mosaic_0001>

<llo_original>
// kernel: tpu_custom_call.1
$region0: #{tpu_custom_call.1}
  #allocation0 [shape = 'u32[]', space=smem, size = 0x4, offset = 0x4, fixed_abs, tag = 'smem constant byte address 0x4 - core index']
  #allocation1 [shape = 'u32[144,128]{1,0:T(1,128)}', space=vmem, size = 0x12000, scoped, tag = 'internal scratch']
  %s0 = inlined_call_operand.vmem [shape: f32[1,32], index: 0, kind: input, shape index: {}]
  %s1 = inlined_call_operand.vmem [shape: f32[32,1], index: 1, kind: input, shape index: {}]
  %s2 = inlined_call_operand.vmem [shape: f32[32,32], index: 2, kind: input, shape index: {}]
  %s3 = inlined_call_operand.hbm [shape: f32[1,1], index: 3, kind: output, shape index: {}]
  %s4 = sld [smem:[#allocation0]]
  $region22: #{tpu_custom_call.1} parent=0
    _
  %s6 = ssub.s32 1, %s4
  %s7 = scalar_select 0, %s6, %s4
  $region1: #{tpu_custom_call.1} parent=0
    #allocation2 [shape = 'u8[512]{0}', space=vmem, size = 0x400, scoped, tag = 'output window, operand 0, single buffered']
    #allocation3 [shape = 's32[1]{0}', space=sflag, size = 0x4, scoped, tag = 'scoped memory for tpu_custom_call.1']
    %8 = vsyncpa [#allocation3], 0
    // Predicated region
    $region2: #{tpu_custom_call.1} parent=1 // pred_check
      _
    $region3: #{tpu_custom_call.1} parent=1 // pred_check_branch
      %10 = sbr.rel (0) target = $region5
    $region4: #{tpu_custom_call.1} parent=1 // pred_region
      _
    $region5: #{tpu_custom_call.1} parent=1 // pred_fallthru
      _
    // Predicated region
    $region6: #{tpu_custom_call.1} parent=1 // pred_check
      _
    $region7: #{tpu_custom_call.1} parent=1 // pred_check_branch
      %12 = sbr.rel (0) target = $region9
    $region8: #{tpu_custom_call.1} parent=1 // pred_region
      _
    $region9: #{tpu_custom_call.1} parent=1 // pred_fallthru
      _
    // Predicated region
    $region10: #{tpu_custom_call.1} parent=1 // pred_check
      _
    $region11: #{tpu_custom_call.1} parent=1 // pred_check_branch
      %14 = sbr.rel (0) target = $region13
    $region12: #{tpu_custom_call.1} parent=1 // pred_region
      _
    $region13: #{tpu_custom_call.1} parent=1 // pred_fallthru
      _
    %v15 = vld [vmem:[%s0] sm:$0x1]
    %v16 = vld [vmem:[%s1] sm:$0xff]
    %v17 = vld [vmem:[%s1 + $0x8] sm:$0xff]
    %v18 = vld [vmem:[%s1 + $0x10] sm:$0xff]
    %v19 = vld [vmem:[%s1 + $0x18] sm:$0xff]
    %v20 = vld [vmem:[%s2] sm:$0xff]
    %v21 = vld [vmem:[%s2 + $0x8] sm:$0xff]
    %v22 = vld [vmem:[%s2 + $0x10] sm:$0xff]
    %v23 = vld [vmem:[%s2 + $0x18] sm:$0xff]
    %25 = vset.pattern.permute.xlu0 0
    %26 = vperm.xlu0 %25, %v16
    %v27 = vpop.permute.xlu0 %26
    %30 = vset.pattern.permute.xlu0 0
    %31 = vperm.xlu0 %30, %v17
    %v32 = vpop.permute.xlu0 %31
    %35 = vset.pattern.permute.xlu0 0
    %36 = vperm.xlu0 %35, %v18
    %v37 = vpop.permute.xlu0 %36
    %40 = vset.pattern.permute.xlu0 0
    %41 = vperm.xlu0 %40, %v19
    %v42 = vpop.permute.xlu0 %41
    %v45 = vlaneseq
    %v46 = vshrl.u32 %v45, 7
    %v47 = vsub.s32 0, %v46
    %v48 = vrot.slane %v15, %v47
    %v50 = vmul.f32 %v27, %v48
    %v51 = vmul.f32 %v32, %v48
    %v52 = vmul.f32 %v37, %v48
    %v53 = vmul.f32 %v42, %v48
    %v54 = vmul.f32 %v20, %v50
    %v55 = vmul.f32 %v21, %v51
    %v56 = vmul.f32 %v22, %v52
    %v57 = vmul.f32 %v23, %v53
    %vm58 = vcmask 261120
    %v59 = vsel %vm58, %v54, 0.0
    %v60 = vsel %vm58, %v55, 0.0
    %v61 = vadd.f32 %v59, %v60
    %v62 = vsel %vm58, %v56, 0.0
    %v63 = vadd.f32 %v61, %v62
    %v64 = vsel %vm58, %v57, 0.0
    %v65 = vadd.f32 %v63, %v64
    %66 = vadd.xlane.f32.xlu0 %v65
    %v67 = vpop.xlane.xlu0 %66
    %v68 = vrot.slane %v67, 4
    %v69 = vadd.f32 %v67, %v68
    %v70 = vrot.slane %v69, 2
    %v71 = vadd.f32 %v69, %v70
    %v72 = vrot.slane %v71, 1
    %v73 = vadd.f32 %v71, %v72
    %s74 = vtos %v73
    %v75 = vstv %s74
    %v76 = vand.u32 2147483647, %v15
    %vm77 = vcmp.le.f32.partialorder %v76, 0.7853982
    %vm78 = vcmp.lt.s32.totalorder %v15, 0
    %v79 = vand.u32 %v15, 2139095040
    %v80 = vshrl.u32 %v79, 23
    %v81 = vsub.s32 %v80, 127
    %v82 = vand.u32 2147483647, %v15
    %v83 = vand.u32 %v82, 8388607
    %v84 = vor.u32 %v83, 8388608
    %v85 = vsub.s32 0, %v84
    %v86 = vadd.s32 %v81, 1
    %vm87 = vcmp.gt.s32.totalorder %v86, 0
    %v88 = vsel %vm87, %v86, 0
    %v89 = vshrl.u32 %v88, 5
    %v90 = vand.u32 %v88, 31
    %v91 = vsub.s32 32, %v90
    %v92 = vshrl.u32 683565275, %v91
    %v93 = vshll.u32 683565275, %v90
    %v94 = vshrl.u32 2475754826, %v91
    %v95 = vor.u32 %v93, %v94
    %v96 = vshll.u32 2475754826, %v90
    %v97 = vshrl.u32 2131351028, %v91
    %v98 = vor.u32 %v96, %v97
    %v99 = vshll.u32 2131351028, %v90
    %v100 = vshrl.u32 2102212464, %v91
    %v101 = vor.u32 %v99, %v100
    %v102 = vshll.u32 2102212464, %v90
    %v103 = vshrl.u32 920167782, %v91
    %v104 = vor.u32 %v102, %v103
    %v105 = vshll.u32 920167782, %v90
    %v106 = vshrl.u32 1326507024, %v91
    %v107 = vor.u32 %v105, %v106
    %vm108 = vcmp.lt.s32.totalorder %v89, 1
    %vm109 = vcmp.lt.s32.totalorder %v89, 2
    %vm110 = vcmp.lt.s32.totalorder %v89, 3
    %vm111 = vcmp.lt.s32.totalorder %v89, 4
    %v112 = vsel %vm108, %v92, %v95
    %v113 = vsel %vm111, %v101, 2102212464
    %v114 = vsel %vm110, %v98, %v113
    %v115 = vsel %vm109, %v112, %v114
    %v116 = vsel %vm108, %v95, %v98
    %v117 = vsel %vm111, %v104, 920167782
    %v118 = vsel %vm110, %v101, %v117
    %v119 = vsel %vm109, %v116, %v118
    %v120 = vsel %vm108, %v98, %v101
    %v121 = vsel %vm111, %v107, 1326507024
    %v122 = vsel %vm110, %v104, %v121
    %v123 = vsel %vm109, %v120, %v122
    %v124 = vshll.u32 %v84, 8
    %v125 = vmul.u32.u64.compose %v124, %v123
    %v126 = vextract.low.u32 %v125
    %v127 = vextract.high.u32 %v125
    %v128 = vmul.u32.u64.compose %v124, %v119
    %v129 = vextract.low.u32 %v128
    %v130 = vextract.high.u32 %v128
    %v131 = vmul.u32 %v124, %v115
    %v132 = vadd.s32 %v127, %v129
    %vm133 = vc.u32 %v127, %v129
    %v134 = vadd.s32 %v130, 1
    %v135 = vsel %vm133, %v134, %v130
    %v136 = vadd.s32 %v131, %v135
    %v137 = vadd.s32 %v136, 536870912
    %v138 = vshrl.u32 %v137, 30
    %v139 = vshll.u32 %v138, 30
    %v140 = vsub.s32 %v136, %v139
    %vm141 = vcmp.lt.s32.totalorder %v140, 0
    %v142 = vsub.s32 0, %v140
    %v143 = vsel %vm141, %v142, %v140
    %v144 = vclz %v143
    %v145 = vsub.s32 %v144, 2
    %vm146 = vcmp.gt.s32.totalorder 0, %v145
    %v147 = vsel %vm146, 0, %v145
    %v148 = vsub.s32 32, %v147
    %v149 = vshll.u32 %v140, %v147
    %v150 = vshrl.u32 %v132, %v148
    %v151 = vor.u32 %v149, %v150
    %v152 = vsub.s32 4294967266, %v147
    %v153 = vadd.s32 %v152, 127
    %v154 = vshll.u32 %v153, 23
    %v155 = vor.u32 4788187, %v154
    %v156 = vand.u32 2147483647, %v155
    %v158 = vcvt.s32.f32 %v151
    %v159 = vmul.f32 %v158, %v156
    %v160 = vxor.u32 %v159, 2147483648
    %v161 = vsel %vm78, %v160, %v159
    %v162 = vsub.s32 4, %v138
    %v163 = vsel %vm78, %v162, %v138
    %v164 = vsel %vm77, %v15, %v161
    %v165 = vsel %vm77, 0, %v163
    %v166 = vcosq.f32.pop %v164
    %v167 = vsinq.f32.pop %v164
    %vm168 = vweird.f32 %v15
    %v169 = vadd.s32 %v165, 3
    %v170 = vand.u32 %v169, 3
    %vm171 = vcmp.lt.s32.totalorder %v170, 2
    %vm172 = vcmp.eq.s32.totalorder %v170, 0
    %v173 = vxor.u32 %v167, 2147483648
    %v174 = vsel %vm172, %v166, %v173
    %vm175 = vcmp.eq.s32.totalorder %v170, 2
    %v176 = vxor.u32 %v166, 2147483648
    %v177 = vsel %vm175, %v176, %v167
    %v178 = vsel %vm171, %v174, %v177
    %v179 = vsel %vm168, nan, %v178
    %vm180 = vcmask 253952
    %v181 = vsel %vm180, %v179, 0.0
    %182 = vadd.xlane.f32.xlu0 %v181
    %v183 = vpop.xlane.xlu0 %182
    %v184 = vrot.slane %v183, 4
    %v185 = vadd.f32 %v183, %v184
    %v186 = vrot.slane %v185, 2
    %v187 = vadd.f32 %v185, %v186
    %v188 = vrot.slane %v187, 1
    %v189 = vadd.f32 %v187, %v188
    %s190 = vtos %v189
    %v191 = vstv %s190
    %v192 = vmul.f32 %v191, 0.1
    %v193 = vadd.f32 %v75, %v192
    %vm194 = vcmask 0
    %195 = vst.msk [vmem:[#allocation2] sm:$0x1] %vm194, %v193
    // Predicated region
    $region14: #{tpu_custom_call.1} parent=1 // pred_check
      _
    $region15: #{tpu_custom_call.1} parent=1 // pred_check_branch
      %197 = sbr.rel (0) target = $region17
    $region16: #{tpu_custom_call.1} parent=1 // pred_region
      %s199 = ssub.s32 16, 16
      %200 = vsyncadd [#allocation3], %s199
      %s202 = sshll.u32 [#allocation2], 4
      %s203 = int_to_ptr.vmem [resolvable:$true] %s202
      %205 = dma.vmem_to_hbm [thread:$0]  %s203, 16, %s3, [#allocation3]
    $region17: #{tpu_custom_call.1} parent=1 // pred_fallthru
      _
    // Predicated region
    $region18: #{tpu_custom_call.1} parent=1 // pred_check
      _
    $region19: #{tpu_custom_call.1} parent=1 // pred_check_branch
      %207 = sbr.rel (0) target = $region21
    $region20: #{tpu_custom_call.1} parent=1 // pred_region
      %208 = dma.done [#allocation3], 16
    $region21: #{tpu_custom_call.1} parent=1 // pred_fallthru
      _
    %209 = vsyncpa [#allocation3], 1

</llo_original>
